<compile_context>
chip_gen: v7x
topology: tpu7x:2x2x1
jax: 0.10.0
libtpu: 0.0.40
codegen_flags: <defaults>
</compile_context>

<pallas_src>
import math

import jax
import jax.numpy as jnp
from jax import lax
from jax.experimental import pallas as pl
from jax.experimental.pallas import tpu as pltpu


def _shortcut_kernel(sel_ref, pmat_ref, x_ref, o_ref):
    """One grid step == one block of `nb` images.

    sel_ref:  (Hp*Wp, S)        one-hot stride-2 downsample + flatten matrix
    pmat_ref: (nb*Cout, nb*C)   one-hot channel-pad placement matrix
    x_ref:    (nb*C,  Hp*Wp)    flattened input rows (one per image-channel)
    o_ref:    (nb*Cout, S)      lane-dense output rows, S = H_out * W_out
    """
    ds = jnp.dot(x_ref[...], sel_ref[...],
                 precision=lax.Precision.HIGHEST,
                 preferred_element_type=jnp.float32)
    out = jnp.dot(pmat_ref[...], ds,
                  precision=lax.Precision.HIGHEST,
                  preferred_element_type=jnp.float32)
    o_ref[...] = out.astype(o_ref.dtype)


def lambda_layer(x, planes):
    """Pallas implementation of the option-A shortcut LambdaLayer (NCHW)."""
    n, c, h, w = x.shape
    pad = planes // 4
    h2 = -(-h // 2)                 # ceil(H/2)
    w2 = -(-w // 2)                 # ceil(W/2)
    s = h2 * w2
    c_out = c + 2 * pad

    # Pad odd spatial dims to even (padded values are never selected).
    if (h % 2) or (w % 2):
        x = jnp.pad(x, ((0, 0), (0, 0), (0, h % 2), (0, w % 2)))
    hp, wp = 2 * h2, 2 * w2

    # One-hot "keep (2i, 2j) and flatten to (i*W2 + j)" matrix: (Hp*Wp, S).
    flat_idx = ((2 * jnp.arange(h2))[:, None] * wp
                + (2 * jnp.arange(w2))[None, :]).reshape(-1)          # (S,)
    sel = (jnp.arange(hp * wp)[:, None] == flat_idx[None, :]).astype(x.dtype)

    # Free, lane-dense 2-D view of the input.
    x_rows = x.reshape(n * c, hp * wp)

    # ---- Block sizing -------------------------------------------------------
    # A few images per step (amortize ~0.35us/step) while keeping the
    # double-buffered tiles comfortably under scoped-VMEM limits on every
    # generation, and keeping sublane block dims multiples of 8 (or full).
    esize = jnp.dtype(x.dtype).itemsize
    per_image_in = max(c * hp * wp * esize, 1)
    nb = max(1, min(n, (1 << 20) // per_image_in))   # ~1 MiB of input per step
    nb = min(nb, 16)                                 # bound PMAT size (nb^2 * C * Cout)
    a1 = 8 // math.gcd(c, 8)
    a2 = 8 // math.gcd(c_out, 8)
    align = a1 * a2 // math.gcd(a1, a2)              # lcm
    nb = (nb // align) * align
    if nb == 0:
        nb = min(align, n)
    if nb >= n:
        nb = n                                       # single full-array block (always legal)
    grid = (pl.cdiv(n, nb),)

    # One-hot channel placement: out row b*Cout + pad + k  <-  ds row b*C + k.
    rows = jnp.arange(nb * c_out)
    cols = jnp.arange(nb * c)
    pmat = ((rows[:, None] // c_out == cols[None, :] // c)
            & (rows[:, None] % c_out == cols[None, :] % c + pad)).astype(x.dtype)

    out_flat = pl.pallas_call(
        _shortcut_kernel,
        out_shape=jax.ShapeDtypeStruct((n * c_out, s), x.dtype),
        grid=grid,
        in_specs=[
            # Constant block index -> resident in VMEM, DMA'd once.
            pl.BlockSpec((hp * wp, s), lambda i: (0, 0)),
            pl.BlockSpec((nb * c_out, nb * c), lambda i: (0, 0)),
            # nb images worth of flattened (image, channel) rows.
            pl.BlockSpec((nb * c, hp * wp), lambda i: (i, 0)),
        ],
        out_specs=pl.BlockSpec((nb * c_out, s), lambda i: (i, 0)),
        compiler_params=pltpu.CompilerParams(
            dimension_semantics=("parallel",),
            vmem_limit_bytes=32 * 1024 * 1024),
    )(sel, pmat, x_rows)

    # Free reshape back to NCHW.
    return out_flat.reshape(n, c_out, h2, w2)


def _reference(x, planes):
    pad = planes // 4
    ds = x[:, :, ::2, ::2]
    return jnp.pad(ds, ((0, 0), (pad, pad), (0, 0), (0, 0)))


if __name__ == "__main__":
    key = jax.random.PRNGKey(0)
    # CIFAR-ResNet-shortcut-like small shapes: N=2, C=4, H=W=16, planes=8 -> pad=2.
    x = jax.random.normal(key, (2, 4, 16, 16), dtype=jnp.float32)
    planes = 8

    out = jax.block_until_ready(lambda_layer(x, planes))

    ref = _reference(x, planes)
    assert out.shape == ref.shape, (out.shape, ref.shape)
    assert jnp.allclose(out, ref, rtol=1e-5, atol=1e-6), "mismatch vs reference"

    print("KERNEL_OK")
</pallas_src>

<mosaic_0001>
module attributes {stable_mosaic.version = 11 : i64} {
  func.func @_shortcut_kernel(%arg0: i32, %arg1: memref<256x64xf32, #tpu.memory_space<vmem>>, %arg2: memref<16x8xf32, #tpu.memory_space<vmem>>, %arg3: memref<8x256xf32, #tpu.memory_space<vmem>>, %arg4: memref<16x64xf32, #tpu.memory_space<vmem>>) attributes {dimension_semantics = [#tpu.dimension_semantics<parallel>], iteration_bounds = array<i64: 1>, scalar_prefetch = 0 : i64, scratch_operands = 0 : i64, tpu.core_type = #tpu.core_type<tc>, window_params = [{pipeline_mode = #tpu.pipeline_mode<synchronous>, transform_indices = @transform_0, window_bounds = array<i64: 256, 64>}, {pipeline_mode = #tpu.pipeline_mode<synchronous>, transform_indices = @transform_1, window_bounds = array<i64: 16, 8>}, {transform_indices = @transform_2, window_bounds = array<i64: 8, 256>}, {transform_indices = @transform_3, window_bounds = array<i64: 16, 64>}]} {
    %c0 = arith.constant 0 : index
    %c0_0 = arith.constant 0 : index
    %0 = vector.load %arg3[%c0, %c0_0] : memref<8x256xf32, #tpu.memory_space<vmem>>, vector<8x256xf32>
    %c0_1 = arith.constant 0 : index
    %c0_2 = arith.constant 0 : index
    %1 = vector.load %arg1[%c0_1, %c0_2] : memref<256x64xf32, #tpu.memory_space<vmem>>, vector<256x64xf32>
    %cst = arith.constant dense<0.000000e+00> : vector<8x64xf32>
    %2 = tpu.matmul %0, %1, %cst {dimension_numbers = #tpu.dot_dimension_numbers<[1], [0], [0], [1], [0, 0, 1, 1], [], []>, precision = #tpu.contract_precision<fp32>} : vector<8x256xf32>, vector<256x64xf32>, vector<8x64xf32> -> vector<8x64xf32>
    %c0_3 = arith.constant 0 : index
    %c0_4 = arith.constant 0 : index
    %3 = vector.load %arg2[%c0_3, %c0_4] : memref<16x8xf32, #tpu.memory_space<vmem>>, vector<16x8xf32>
    %cst_5 = arith.constant dense<0.000000e+00> : vector<16x64xf32>
    %4 = tpu.matmul %3, %2, %cst_5 {dimension_numbers = #tpu.dot_dimension_numbers<[1], [0], [0], [1], [0, 0, 1, 1], [], []>, precision = #tpu.contract_precision<fp32>} : vector<16x8xf32>, vector<8x64xf32>, vector<16x64xf32> -> vector<16x64xf32>
    %c0_6 = arith.constant 0 : index
    %c0_7 = arith.constant 0 : index
    %5 = vector.load %arg4[%c0_6, %c0_7] : memref<16x64xf32, #tpu.memory_space<vmem>>, vector<16x64xf32>
    tpu.vector_store %arg4[%c0_6, %c0_7], %4 {strides = array<i32>} : memref<16x64xf32, #tpu.memory_space<vmem>>, vector<16x64xf32>,
    return
  }
  func.func @transform_0(%arg0: i32) -> (i32, i32) {
    %c0_i32 = arith.constant 0 : i32
    %c0_i32_0 = arith.constant 0 : i32
    %c0_i32_1 = arith.constant 0 : i32
    return %c0_i32, %c0_i32_0 : i32, i32
  }
  func.func @transform_1(%arg0: i32) -> (i32, i32) {
    %c0_i32 = arith.constant 0 : i32
    %c0_i32_0 = arith.constant 0 : i32
    %c0_i32_1 = arith.constant 0 : i32
    return %c0_i32, %c0_i32_0 : i32, i32
  }
  func.func @transform_2(%arg0: i32) -> (i32, i32) {
    %c0_i32 = arith.constant 0 : i32
    %c0_i32_0 = arith.constant 0 : i32
    return %arg0, %c0_i32 : i32, i32
  }
  func.func @transform_3(%arg0: i32) -> (i32, i32) {
    %c0_i32 = arith.constant 0 : i32
    %c0_i32_0 = arith.constant 0 : i32
    return %arg0, %c0_i32 : i32, i32
  }
}

</mosaic_0001>

<llo_original>
// kernel: tpu_custom_call.1
$region0: #{tpu_custom_call.1}
  #allocation0 [shape = 'u32[]', space=smem, size = 0x4, offset = 0x4, fixed_abs, tag = 'smem constant byte address 0x4 - core index']
  #allocation1 [shape = 'u32[144,128]{1,0:T(1,128)}', space=vmem, size = 0x12000, scoped, tag = 'internal scratch']
  %s0 = inlined_call_operand.vmem [shape: f32[256,64], index: 0, kind: input, shape index: {}]
  %s1 = inlined_call_operand.vmem [shape: f32[16,8], index: 1, kind: input, shape index: {}]
  %s2 = inlined_call_operand.vmem [shape: f32[8,256], index: 2, kind: input, shape index: {}]
  %s3 = inlined_call_operand.hbm [shape: f32[16,64], index: 3, kind: output, shape index: {}]
  %s4 = sld [smem:[#allocation0]]
  $region22: #{tpu_custom_call.1} parent=0
    _
  %s6 = ssub.s32 1, %s4
  %s7 = scalar_select 0, %s6, %s4
  $region1: #{tpu_custom_call.1} parent=0
    #allocation2 [shape = 'u8[8192]{0}', space=vmem, size = 0x2000, scoped, tag = 'output window, operand 0, single buffered']
    #allocation3 [shape = 's32[1]{0}', space=sflag, size = 0x4, scoped, tag = 'scoped memory for tpu_custom_call.1']
    %8 = vsyncpa [#allocation3], 0
    // Predicated region
    $region2: #{tpu_custom_call.1} parent=1 // pred_check
      _
    $region3: #{tpu_custom_call.1} parent=1 // pred_check_branch
      %10 = sbr.rel (0) target = $region5
    $region4: #{tpu_custom_call.1} parent=1 // pred_region
      _
    $region5: #{tpu_custom_call.1} parent=1 // pred_fallthru
      _
    // Predicated region
    $region6: #{tpu_custom_call.1} parent=1 // pred_check
      _
    $region7: #{tpu_custom_call.1} parent=1 // pred_check_branch
      %12 = sbr.rel (0) target = $region9
    $region8: #{tpu_custom_call.1} parent=1 // pred_region
      _
    $region9: #{tpu_custom_call.1} parent=1 // pred_fallthru
      _
    // Predicated region
    $region10: #{tpu_custom_call.1} parent=1 // pred_check
      _
    $region11: #{tpu_custom_call.1} parent=1 // pred_check_branch
      %14 = sbr.rel (0) target = $region13
    $region12: #{tpu_custom_call.1} parent=1 // pred_region
      _
    $region13: #{tpu_custom_call.1} parent=1 // pred_fallthru
      _
    %v15 = vld [vmem:[%s2] sm:$0xff]
    %v16 = vld [vmem:[%s2 + $0x8] sm:$0xff]
    %v17 = vld [vmem:[%s0] sm:$0xff]
    %v18 = vld [vmem:[%s0 + $0x8] sm:$0xff]
    %v19 = vld [vmem:[%s0 + $0x10] sm:$0xff]
    %v20 = vld [vmem:[%s0 + $0x18] sm:$0xff]
    %v21 = vld [vmem:[%s0 + $0x20] sm:$0xff]
    %v22 = vld [vmem:[%s0 + $0x28] sm:$0xff]
    %v23 = vld [vmem:[%s0 + $0x30] sm:$0xff]
    %v24 = vld [vmem:[%s0 + $0x38] sm:$0xff]
    %v25 = vld [vmem:[%s0 + $0x40] sm:$0xff]
    %v26 = vld [vmem:[%s0 + $0x48] sm:$0xff]
    %v27 = vld [vmem:[%s0 + $0x50] sm:$0xff]
    %v28 = vld [vmem:[%s0 + $0x58] sm:$0xff]
    %v29 = vld [vmem:[%s0 + $0x60] sm:$0xff]
    %v30 = vld [vmem:[%s0 + $0x68] sm:$0xff]
    %v31 = vld [vmem:[%s0 + $0x70] sm:$0xff]
    %v32 = vld [vmem:[%s0 + $0x78] sm:$0xff]
    %v33 = vld [vmem:[%s0 + $0x80] sm:$0xff]
    %v34 = vld [vmem:[%s0 + $0x88] sm:$0xff]
    %v35 = vld [vmem:[%s0 + $0x90] sm:$0xff]
    %v36 = vld [vmem:[%s0 + $0x98] sm:$0xff]
    %v37 = vld [vmem:[%s0 + $0xa0] sm:$0xff]
    %v38 = vld [vmem:[%s0 + $0xa8] sm:$0xff]
    %v39 = vld [vmem:[%s0 + $0xb0] sm:$0xff]
    %v40 = vld [vmem:[%s0 + $0xb8] sm:$0xff]
    %v41 = vld [vmem:[%s0 + $0xc0] sm:$0xff]
    %v42 = vld [vmem:[%s0 + $0xc8] sm:$0xff]
    %v43 = vld [vmem:[%s0 + $0xd0] sm:$0xff]
    %v44 = vld [vmem:[%s0 + $0xd8] sm:$0xff]
    %v45 = vld [vmem:[%s0 + $0xe0] sm:$0xff]
    %v46 = vld [vmem:[%s0 + $0xe8] sm:$0xff]
    %v47 = vld [vmem:[%s0 + $0xf0] sm:$0xff]
    %v48 = vld [vmem:[%s0 + $0xf8] sm:$0xff]
    %49 = vmatprep.subr.mxu0 0.0
    %v50 = vand.u32 %v17, 4294901760
    %51 = vmatpush1.msra.mxu0 %v50
    %52 = vmatprep.subr.mxu0 0.0
    %v53 = vand.u32 %v18, 4294901760
    %54 = vmatpush1.msra.mxu0 %v53
    %55 = vmatprep.subr.mxu0 0.0
    %v56 = vand.u32 %v19, 4294901760
    %57 = vmatpush1.msra.mxu0 %v56
    %58 = vmatprep.subr.mxu0 0.0
    %v59 = vand.u32 %v20, 4294901760
    %60 = vmatpush1.msra.mxu0 %v59
    %61 = vmatprep.subr.mxu0 0.0
    %v62 = vand.u32 %v21, 4294901760
    %63 = vmatpush1.msra.mxu0 %v62
    %64 = vmatprep.subr.mxu0 0.0
    %v65 = vand.u32 %v22, 4294901760
    %66 = vmatpush1.msra.mxu0 %v65
    %67 = vmatprep.subr.mxu0 0.0
    %v68 = vand.u32 %v23, 4294901760
    %69 = vmatpush1.msra.mxu0 %v68
    %70 = vmatprep.subr.mxu0 0.0
    %v71 = vand.u32 %v24, 4294901760
    %72 = vmatpush1.msra.mxu0 %v71
    %73 = vmatprep.subr.mxu0 0.0
    %v74 = vand.u32 %v25, 4294901760
    %75 = vmatpush1.msra.mxu0 %v74
    %76 = vmatprep.subr.mxu0 0.0
    %v77 = vand.u32 %v26, 4294901760
    %78 = vmatpush1.msra.mxu0 %v77
    %79 = vmatprep.subr.mxu0 0.0
    %v80 = vand.u32 %v27, 4294901760
    %81 = vmatpush1.msra.mxu0 %v80
    %82 = vmatprep.subr.mxu0 0.0
    %v83 = vand.u32 %v28, 4294901760
    %84 = vmatpush1.msra.mxu0 %v83
    %85 = vmatprep.subr.mxu0 0.0
    %v86 = vand.u32 %v29, 4294901760
    %87 = vmatpush1.msra.mxu0 %v86
    %88 = vmatprep.subr.mxu0 0.0
    %v89 = vand.u32 %v30, 4294901760
    %90 = vmatpush1.msra.mxu0 %v89
    %91 = vmatprep.subr.mxu0 0.0
    %v92 = vand.u32 %v31, 4294901760
    %93 = vmatpush1.msra.mxu0 %v92
    %94 = vmatprep.subr.mxu0 0.0
    %v95 = vand.u32 %v32, 4294901760
    %96 = vmatpush1.msra.mxu0 %v95
    %97 = vmatprep.subr.mxu0 0.0
    %v98 = vand.u32 %v33, 4294901760
    %99 = vmatpush1.msra.mxu0 %v98
    %100 = vmatprep.subr.mxu0 0.0
    %v101 = vand.u32 %v34, 4294901760
    %102 = vmatpush1.msra.mxu0 %v101
    %103 = vmatprep.subr.mxu0 0.0
    %v104 = vand.u32 %v35, 4294901760
    %105 = vmatpush1.msra.mxu0 %v104
    %106 = vmatprep.subr.mxu0 0.0
    %v107 = vand.u32 %v36, 4294901760
    %108 = vmatpush1.msra.mxu0 %v107
    %109 = vmatprep.subr.mxu0 0.0
    %v110 = vand.u32 %v37, 4294901760
    %111 = vmatpush1.msra.mxu0 %v110
    %112 = vmatprep.subr.mxu0 0.0
    %v113 = vand.u32 %v38, 4294901760
    %114 = vmatpush1.msra.mxu0 %v113
    %115 = vmatprep.subr.mxu0 0.0
    %v116 = vand.u32 %v39, 4294901760
    %117 = vmatpush1.msra.mxu0 %v116
    %118 = vmatprep.subr.mxu0 0.0
    %v119 = vand.u32 %v40, 4294901760
    %120 = vmatpush1.msra.mxu0 %v119
    %121 = vmatprep.subr.mxu0 0.0
    %v122 = vand.u32 %v41, 4294901760
    %123 = vmatpush1.msra.mxu0 %v122
    %124 = vmatprep.subr.mxu0 0.0
    %v125 = vand.u32 %v42, 4294901760
    %126 = vmatpush1.msra.mxu0 %v125
    %127 = vmatprep.subr.mxu0 0.0
    %v128 = vand.u32 %v43, 4294901760
    %129 = vmatpush1.msra.mxu0 %v128
    %130 = vmatprep.subr.mxu0 0.0
    %v131 = vand.u32 %v44, 4294901760
    %132 = vmatpush1.msra.mxu0 %v131
    %133 = vmatprep.subr.mxu0 0.0
    %v134 = vand.u32 %v45, 4294901760
    %135 = vmatpush1.msra.mxu0 %v134
    %136 = vmatprep.subr.mxu0 0.0
    %v137 = vand.u32 %v46, 4294901760
    %138 = vmatpush1.msra.mxu0 %v137
    %139 = vmatprep.subr.mxu0 0.0
    %v140 = vand.u32 %v47, 4294901760
    %141 = vmatpush1.msra.mxu0 %v140
    %142 = vmatprep.subr.mxu0 0.0
    %v143 = vand.u32 %v48, 4294901760
    %144 = vmatpush1.msra.mxu0 %v143
    %v145 = vand.u32 %v16, 4294901760
    %v146 = vsub.f32 %v16, %v145
    %v147 = vand.u32 %v146, 4294901760
    %v148 = vsub.f32 %v146, %v147
    %v149 = vand.u32 %v148, 4294901760
    %150 = vmatprep.mubr.f32.mxu0 %v149
    %v151 = vand.u32 %v15, 4294901760
    %v152 = vsub.f32 %v15, %v151
    %v153 = vand.u32 %v152, 4294901760
    %v154 = vsub.f32 %v152, %v153
    %v155 = vand.u32 %v154, 4294901760
    %156 = vmatmul.mubr.f32.gmra.mrb[0].mxu0 %v155
    %v157 = vpop.f32.mrb[0].mxu0
    %v158 = vadd.f32 0.0, %v157
    %v159 = vpop.f32.mrb[0].mxu0
    %160 = vdwg.mxu0
    %161 = vmatprep.subr.mxu0 0.0
    %v162 = vand.u32 %v17, 4294901760
    %v163 = vsub.f32 %v17, %v162
    %v164 = vand.u32 %v163, 4294901760
    %v165 = vsub.f32 %v163, %v164
    %v166 = vand.u32 %v165, 4294901760
    %167 = vmatpush1.msra.mxu0 %v166
    %168 = vmatprep.subr.mxu0 0.0
    %v169 = vand.u32 %v18, 4294901760
    %v170 = vsub.f32 %v18, %v169
    %v171 = vand.u32 %v170, 4294901760
    %v172 = vsub.f32 %v170, %v171
    %v173 = vand.u32 %v172, 4294901760
    %174 = vmatpush1.msra.mxu0 %v173
    %175 = vmatprep.subr.mxu0 0.0
    %v176 = vand.u32 %v19, 4294901760
    %v177 = vsub.f32 %v19, %v176
    %v178 = vand.u32 %v177, 4294901760
    %v179 = vsub.f32 %v177, %v178
    %v180 = vand.u32 %v179, 4294901760
    %181 = vmatpush1.msra.mxu0 %v180
    %182 = vmatprep.subr.mxu0 0.0
    %v183 = vand.u32 %v20, 4294901760
    %v184 = vsub.f32 %v20, %v183
    %v185 = vand.u32 %v184, 4294901760
    %v186 = vsub.f32 %v184, %v185
    %v187 = vand.u32 %v186, 4294901760
    %188 = vmatpush1.msra.mxu0 %v187
    %189 = vmatprep.subr.mxu0 0.0
    %v190 = vand.u32 %v21, 4294901760
    %v191 = vsub.f32 %v21, %v190
    %v192 = vand.u32 %v191, 4294901760
    %v193 = vsub.f32 %v191, %v192
    %v194 = vand.u32 %v193, 4294901760
    %195 = vmatpush1.msra.mxu0 %v194
    %196 = vmatprep.subr.mxu0 0.0
    %v197 = vand.u32 %v22, 4294901760
    %v198 = vsub.f32 %v22, %v197
    %v199 = vand.u32 %v198, 4294901760
    %v200 = vsub.f32 %v198, %v199
    %v201 = vand.u32 %v200, 4294901760
    %202 = vmatpush1.msra.mxu0 %v201
    %203 = vmatprep.subr.mxu0 0.0
    %v204 = vand.u32 %v23, 4294901760
    %v205 = vsub.f32 %v23, %v204
    %v206 = vand.u32 %v205, 4294901760
    %v207 = vsub.f32 %v205, %v206
    %v208 = vand.u32 %v207, 4294901760
    %209 = vmatpush1.msra.mxu0 %v208
    %210 = vmatprep.subr.mxu0 0.0
    %v211 = vand.u32 %v24, 4294901760
    %v212 = vsub.f32 %v24, %v211
    %v213 = vand.u32 %v212, 4294901760
    %v214 = vsub.f32 %v212, %v213
    %v215 = vand.u32 %v214, 4294901760
    %216 = vmatpush1.msra.mxu0 %v215
    %217 = vmatprep.subr.mxu0 0.0
    %v218 = vand.u32 %v25, 4294901760
    %v219 = vsub.f32 %v25, %v218
    %v220 = vand.u32 %v219, 4294901760
    %v221 = vsub.f32 %v219, %v220
    %v222 = vand.u32 %v221, 4294901760
    %223 = vmatpush1.msra.mxu0 %v222
    %224 = vmatprep.subr.mxu0 0.0
    %v225 = vand.u32 %v26, 4294901760
    %v226 = vsub.f32 %v26, %v225
    %v227 = vand.u32 %v226, 4294901760
    %v228 = vsub.f32 %v226, %v227
    %v229 = vand.u32 %v228, 4294901760
    %230 = vmatpush1.msra.mxu0 %v229
    %231 = vmatprep.subr.mxu0 0.0
    %v232 = vand.u32 %v27, 4294901760
    %v233 = vsub.f32 %v27, %v232
    %v234 = vand.u32 %v233, 4294901760
    %v235 = vsub.f32 %v233, %v234
    %v236 = vand.u32 %v235, 4294901760
    %237 = vmatpush1.msra.mxu0 %v236
    %238 = vmatprep.subr.mxu0 0.0
    %v239 = vand.u32 %v28, 4294901760
    %v240 = vsub.f32 %v28, %v239
    %v241 = vand.u32 %v240, 4294901760
    %v242 = vsub.f32 %v240, %v241
    %v243 = vand.u32 %v242, 4294901760
    %244 = vmatpush1.msra.mxu0 %v243
    %245 = vmatprep.subr.mxu0 0.0
    %v246 = vand.u32 %v29, 4294901760
    %v247 = vsub.f32 %v29, %v246
    %v248 = vand.u32 %v247, 4294901760
    %v249 = vsub.f32 %v247, %v248
    %v250 = vand.u32 %v249, 4294901760
    %251 = vmatpush1.msra.mxu0 %v250
    %252 = vmatprep.subr.mxu0 0.0
    %v253 = vand.u32 %v30, 4294901760
    %v254 = vsub.f32 %v30, %v253
    %v255 = vand.u32 %v254, 4294901760
    %v256 = vsub.f32 %v254, %v255
    %v257 = vand.u32 %v256, 4294901760
    %258 = vmatpush1.msra.mxu0 %v257
    %259 = vmatprep.subr.mxu0 0.0
    %v260 = vand.u32 %v31, 4294901760
    %v261 = vsub.f32 %v31, %v260
    %v262 = vand.u32 %v261, 4294901760
    %v263 = vsub.f32 %v261, %v262
    %v264 = vand.u32 %v263, 4294901760
    %265 = vmatpush1.msra.mxu0 %v264
    %266 = vmatprep.subr.mxu0 0.0
    %v267 = vand.u32 %v32, 4294901760
    %v268 = vsub.f32 %v32, %v267
    %v269 = vand.u32 %v268, 4294901760
    %v270 = vsub.f32 %v268, %v269
    %v271 = vand.u32 %v270, 4294901760
    %272 = vmatpush1.msra.mxu0 %v271
    %273 = vmatprep.subr.mxu0 0.0
    %v274 = vand.u32 %v33, 4294901760
    %v275 = vsub.f32 %v33, %v274
    %v276 = vand.u32 %v275, 4294901760
    %v277 = vsub.f32 %v275, %v276
    %v278 = vand.u32 %v277, 4294901760
    %279 = vmatpush1.msra.mxu0 %v278
    %280 = vmatprep.subr.mxu0 0.0
    %v281 = vand.u32 %v34, 4294901760
    %v282 = vsub.f32 %v34, %v281
    %v283 = vand.u32 %v282, 4294901760
    %v284 = vsub.f32 %v282, %v283
    %v285 = vand.u32 %v284, 4294901760
    %286 = vmatpush1.msra.mxu0 %v285
    %287 = vmatprep.subr.mxu0 0.0
    %v288 = vand.u32 %v35, 4294901760
    %v289 = vsub.f32 %v35, %v288
    %v290 = vand.u32 %v289, 4294901760
    %v291 = vsub.f32 %v289, %v290
    %v292 = vand.u32 %v291, 4294901760
    %293 = vmatpush1.msra.mxu0 %v292
    %294 = vmatprep.subr.mxu0 0.0
    %v295 = vand.u32 %v36, 4294901760
    %v296 = vsub.f32 %v36, %v295
    %v297 = vand.u32 %v296, 4294901760
    %v298 = vsub.f32 %v296, %v297
    %v299 = vand.u32 %v298, 4294901760
    %300 = vmatpush1.msra.mxu0 %v299
    %301 = vmatprep.subr.mxu0 0.0
    %v302 = vand.u32 %v37, 4294901760
    %v303 = vsub.f32 %v37, %v302
    %v304 = vand.u32 %v303, 4294901760
    %v305 = vsub.f32 %v303, %v304
    %v306 = vand.u32 %v305, 4294901760
    %307 = vmatpush1.msra.mxu0 %v306
    %308 = vmatprep.subr.mxu0 0.0
    %v309 = vand.u32 %v38, 4294901760
    %v310 = vsub.f32 %v38, %v309
    %v311 = vand.u32 %v310, 4294901760
    %v312 = vsub.f32 %v310, %v311
    %v313 = vand.u32 %v312, 4294901760
    %314 = vmatpush1.msra.mxu0 %v313
    %315 = vmatprep.subr.mxu0 0.0
    %v316 = vand.u32 %v39, 4294901760
    %v317 = vsub.f32 %v39, %v316
    %v318 = vand.u32 %v317, 4294901760
    %v319 = vsub.f32 %v317, %v318
    %v320 = vand.u32 %v319, 4294901760
    %321 = vmatpush1.msra.mxu0 %v320
    %322 = vmatprep.subr.mxu0 0.0
    %v323 = vand.u32 %v40, 4294901760
    %v324 = vsub.f32 %v40, %v323
    %v325 = vand.u32 %v324, 4294901760
    %v326 = vsub.f32 %v324, %v325
    %v327 = vand.u32 %v326, 4294901760
    %328 = vmatpush1.msra.mxu0 %v327
    %329 = vmatprep.subr.mxu0 0.0
    %v330 = vand.u32 %v41, 4294901760
    %v331 = vsub.f32 %v41, %v330
    %v332 = vand.u32 %v331, 4294901760
    %v333 = vsub.f32 %v331, %v332
    %v334 = vand.u32 %v333, 4294901760
    %335 = vmatpush1.msra.mxu0 %v334
    %336 = vmatprep.subr.mxu0 0.0
    %v337 = vand.u32 %v42, 4294901760
    %v338 = vsub.f32 %v42, %v337
    %v339 = vand.u32 %v338, 4294901760
    %v340 = vsub.f32 %v338, %v339
    %v341 = vand.u32 %v340, 4294901760
    %342 = vmatpush1.msra.mxu0 %v341
    %343 = vmatprep.subr.mxu0 0.0
    %v344 = vand.u32 %v43, 4294901760
    %v345 = vsub.f32 %v43, %v344
    %v346 = vand.u32 %v345, 4294901760
    %v347 = vsub.f32 %v345, %v346
    %v348 = vand.u32 %v347, 4294901760
    %349 = vmatpush1.msra.mxu0 %v348
    %350 = vmatprep.subr.mxu0 0.0
    %v351 = vand.u32 %v44, 4294901760
    %v352 = vsub.f32 %v44, %v351
    %v353 = vand.u32 %v352, 4294901760
    %v354 = vsub.f32 %v352, %v353
    %v355 = vand.u32 %v354, 4294901760
    %356 = vmatpush1.msra.mxu0 %v355
    %357 = vmatprep.subr.mxu0 0.0
    %v358 = vand.u32 %v45, 4294901760
    %v359 = vsub.f32 %v45, %v358
    %v360 = vand.u32 %v359, 4294901760
    %v361 = vsub.f32 %v359, %v360
    %v362 = vand.u32 %v361, 4294901760
    %363 = vmatpush1.msra.mxu0 %v362
    %364 = vmatprep.subr.mxu0 0.0
    %v365 = vand.u32 %v46, 4294901760
    %v366 = vsub.f32 %v46, %v365
    %v367 = vand.u32 %v366, 4294901760
    %v368 = vsub.f32 %v366, %v367
    %v369 = vand.u32 %v368, 4294901760
    %370 = vmatpush1.msra.mxu0 %v369
    %371 = vmatprep.subr.mxu0 0.0
    %v372 = vand.u32 %v47, 4294901760
    %v373 = vsub.f32 %v47, %v372
    %v374 = vand.u32 %v373, 4294901760
    %v375 = vsub.f32 %v373, %v374
    %v376 = vand.u32 %v375, 4294901760
    %377 = vmatpush1.msra.mxu0 %v376
    %378 = vmatprep.subr.mxu0 0.0
    %v379 = vand.u32 %v48, 4294901760
    %v380 = vsub.f32 %v48, %v379
    %v381 = vand.u32 %v380, 4294901760
    %v382 = vsub.f32 %v380, %v381
    %v383 = vand.u32 %v382, 4294901760
    %384 = vmatpush1.msra.mxu0 %v383
    %v385 = vand.u32 %v16, 4294901760
    %386 = vmatprep.mubr.f32.mxu0 %v385
    %v387 = vand.u32 %v15, 4294901760
    %388 = vmatmul.mubr.f32.gmra.mrb[0].mxu0 %v387
    %v389 = vpop.f32.mrb[0].mxu0
    %v390 = vadd.f32 %v158, %v389
    %v391 = vpop.f32.mrb[0].mxu0
    %392 = vdwg.mxu0
    %393 = vmatprep.subr.mxu0 0.0
    %v394 = vand.u32 %v17, 4294901760
    %v395 = vsub.f32 %v17, %v394
    %396 = vmatpush1.msra.mxu0 %v395
    %397 = vmatprep.subr.mxu0 0.0
    %v398 = vand.u32 %v18, 4294901760
    %v399 = vsub.f32 %v18, %v398
    %400 = vmatpush1.msra.mxu0 %v399
    %401 = vmatprep.subr.mxu0 0.0
    %v402 = vand.u32 %v19, 4294901760
    %v403 = vsub.f32 %v19, %v402
    %404 = vmatpush1.msra.mxu0 %v403
    %405 = vmatprep.subr.mxu0 0.0
    %v406 = vand.u32 %v20, 4294901760
    %v407 = vsub.f32 %v20, %v406
    %408 = vmatpush1.msra.mxu0 %v407
    %409 = vmatprep.subr.mxu0 0.0
    %v410 = vand.u32 %v21, 4294901760
    %v411 = vsub.f32 %v21, %v410
    %412 = vmatpush1.msra.mxu0 %v411
    %413 = vmatprep.subr.mxu0 0.0
    %v414 = vand.u32 %v22, 4294901760
    %v415 = vsub.f32 %v22, %v414
    %416 = vmatpush1.msra.mxu0 %v415
    %417 = vmatprep.subr.mxu0 0.0
    %v418 = vand.u32 %v23, 4294901760
    %v419 = vsub.f32 %v23, %v418
    %420 = vmatpush1.msra.mxu0 %v419
    %421 = vmatprep.subr.mxu0 0.0
    %v422 = vand.u32 %v24, 4294901760
    %v423 = vsub.f32 %v24, %v422
    %424 = vmatpush1.msra.mxu0 %v423
    %425 = vmatprep.subr.mxu0 0.0
    %v426 = vand.u32 %v25, 4294901760
    %v427 = vsub.f32 %v25, %v426
    %428 = vmatpush1.msra.mxu0 %v427
    %429 = vmatprep.subr.mxu0 0.0
    %v430 = vand.u32 %v26, 4294901760
    %v431 = vsub.f32 %v26, %v430
    %432 = vmatpush1.msra.mxu0 %v431
    %433 = vmatprep.subr.mxu0 0.0
    %v434 = vand.u32 %v27, 4294901760
    %v435 = vsub.f32 %v27, %v434
    %436 = vmatpush1.msra.mxu0 %v435
    %437 = vmatprep.subr.mxu0 0.0
    %v438 = vand.u32 %v28, 4294901760
    %v439 = vsub.f32 %v28, %v438
    %440 = vmatpush1.msra.mxu0 %v439
    %441 = vmatprep.subr.mxu0 0.0
    %v442 = vand.u32 %v29, 4294901760
    %v443 = vsub.f32 %v29, %v442
    %444 = vmatpush1.msra.mxu0 %v443
    %445 = vmatprep.subr.mxu0 0.0
    %v446 = vand.u32 %v30, 4294901760
    %v447 = vsub.f32 %v30, %v446
    %448 = vmatpush1.msra.mxu0 %v447
    %449 = vmatprep.subr.mxu0 0.0
    %v450 = vand.u32 %v31, 4294901760
    %v451 = vsub.f32 %v31, %v450
    %452 = vmatpush1.msra.mxu0 %v451
    %453 = vmatprep.subr.mxu0 0.0
    %v454 = vand.u32 %v32, 4294901760
    %v455 = vsub.f32 %v32, %v454
    %456 = vmatpush1.msra.mxu0 %v455
    %457 = vmatprep.subr.mxu0 0.0
    %v458 = vand.u32 %v33, 4294901760
    %v459 = vsub.f32 %v33, %v458
    %460 = vmatpush1.msra.mxu0 %v459
    %461 = vmatprep.subr.mxu0 0.0
    %v462 = vand.u32 %v34, 4294901760
    %v463 = vsub.f32 %v34, %v462
    %464 = vmatpush1.msra.mxu0 %v463
    %465 = vmatprep.subr.mxu0 0.0
    %v466 = vand.u32 %v35, 4294901760
    %v467 = vsub.f32 %v35, %v466
    %468 = vmatpush1.msra.mxu0 %v467
    %469 = vmatprep.subr.mxu0 0.0
    %v470 = vand.u32 %v36, 4294901760
    %v471 = vsub.f32 %v36, %v470
    %472 = vmatpush1.msra.mxu0 %v471
    %473 = vmatprep.subr.mxu0 0.0
    %v474 = vand.u32 %v37, 4294901760
    %v475 = vsub.f32 %v37, %v474
    %476 = vmatpush1.msra.mxu0 %v475
    %477 = vmatprep.subr.mxu0 0.0
    %v478 = vand.u32 %v38, 4294901760
    %v479 = vsub.f32 %v38, %v478
    %480 = vmatpush1.msra.mxu0 %v479
    %481 = vmatprep.subr.mxu0 0.0
    %v482 = vand.u32 %v39, 4294901760
    %v483 = vsub.f32 %v39, %v482
    %484 = vmatpush1.msra.mxu0 %v483
    %485 = vmatprep.subr.mxu0 0.0
    %v486 = vand.u32 %v40, 4294901760
    %v487 = vsub.f32 %v40, %v486
    %488 = vmatpush1.msra.mxu0 %v487
    %489 = vmatprep.subr.mxu0 0.0
    %v490 = vand.u32 %v41, 4294901760
    %v491 = vsub.f32 %v41, %v490
    %492 = vmatpush1.msra.mxu0 %v491
    %493 = vmatprep.subr.mxu0 0.0
    %v494 = vand.u32 %v42, 4294901760
    %v495 = vsub.f32 %v42, %v494
    %496 = vmatpush1.msra.mxu0 %v495
    %497 = vmatprep.subr.mxu0 0.0
    %v498 = vand.u32 %v43, 4294901760
    %v499 = vsub.f32 %v43, %v498
    %500 = vmatpush1.msra.mxu0 %v499
    %501 = vmatprep.subr.mxu0 0.0
    %v502 = vand.u32 %v44, 4294901760
    %v503 = vsub.f32 %v44, %v502
    %504 = vmatpush1.msra.mxu0 %v503
    %505 = vmatprep.subr.mxu0 0.0
    %v506 = vand.u32 %v45, 4294901760
    %v507 = vsub.f32 %v45, %v506
    %508 = vmatpush1.msra.mxu0 %v507
    %509 = vmatprep.subr.mxu0 0.0
    %v510 = vand.u32 %v46, 4294901760
    %v511 = vsub.f32 %v46, %v510
    %512 = vmatpush1.msra.mxu0 %v511
    %513 = vmatprep.subr.mxu0 0.0
    %v514 = vand.u32 %v47, 4294901760
    %v515 = vsub.f32 %v47, %v514
    %516 = vmatpush1.msra.mxu0 %v515
    %517 = vmatprep.subr.mxu0 0.0
    %v518 = vand.u32 %v48, 4294901760
    %v519 = vsub.f32 %v48, %v518
    %520 = vmatpush1.msra.mxu0 %v519
    %v521 = vand.u32 %v16, 4294901760
    %v522 = vsub.f32 %v16, %v521
    %523 = vmatprep.mubr.f32.mxu0 %v522
    %v524 = vand.u32 %v15, 4294901760
    %v525 = vsub.f32 %v15, %v524
    %526 = vmatmul.mubr.f32.gmra.mrb[0].mxu0 %v525
    %v527 = vpop.f32.mrb[0].mxu0
    %v528 = vadd.f32 %v390, %v527
    %v529 = vpop.f32.mrb[0].mxu0
    %530 = vdwg.mxu0
    %531 = vmatprep.subr.mxu0 0.0
    %v532 = vand.u32 %v17, 4294901760
    %533 = vmatpush1.msra.mxu0 %v532
    %534 = vmatprep.subr.mxu0 0.0
    %v535 = vand.u32 %v18, 4294901760
    %536 = vmatpush1.msra.mxu0 %v535
    %537 = vmatprep.subr.mxu0 0.0
    %v538 = vand.u32 %v19, 4294901760
    %539 = vmatpush1.msra.mxu0 %v538
    %540 = vmatprep.subr.mxu0 0.0
    %v541 = vand.u32 %v20, 4294901760
    %542 = vmatpush1.msra.mxu0 %v541
    %543 = vmatprep.subr.mxu0 0.0
    %v544 = vand.u32 %v21, 4294901760
    %545 = vmatpush1.msra.mxu0 %v544
    %546 = vmatprep.subr.mxu0 0.0
    %v547 = vand.u32 %v22, 4294901760
    %548 = vmatpush1.msra.mxu0 %v547
    %549 = vmatprep.subr.mxu0 0.0
    %v550 = vand.u32 %v23, 4294901760
    %551 = vmatpush1.msra.mxu0 %v550
    %552 = vmatprep.subr.mxu0 0.0
    %v553 = vand.u32 %v24, 4294901760
    %554 = vmatpush1.msra.mxu0 %v553
    %555 = vmatprep.subr.mxu0 0.0
    %v556 = vand.u32 %v25, 4294901760
    %557 = vmatpush1.msra.mxu0 %v556
    %558 = vmatprep.subr.mxu0 0.0
    %v559 = vand.u32 %v26, 4294901760
    %560 = vmatpush1.msra.mxu0 %v559
    %561 = vmatprep.subr.mxu0 0.0
    %v562 = vand.u32 %v27, 4294901760
    %563 = vmatpush1.msra.mxu0 %v562
    %564 = vmatprep.subr.mxu0 0.0
    %v565 = vand.u32 %v28, 4294901760
    %566 = vmatpush1.msra.mxu0 %v565
    %567 = vmatprep.subr.mxu0 0.0
    %v568 = vand.u32 %v29, 4294901760
    %569 = vmatpush1.msra.mxu0 %v568
    %570 = vmatprep.subr.mxu0 0.0
    %v571 = vand.u32 %v30, 4294901760
    %572 = vmatpush1.msra.mxu0 %v571
    %573 = vmatprep.subr.mxu0 0.0
    %v574 = vand.u32 %v31, 4294901760
    %575 = vmatpush1.msra.mxu0 %v574
    %576 = vmatprep.subr.mxu0 0.0
    %v577 = vand.u32 %v32, 4294901760
    %578 = vmatpush1.msra.mxu0 %v577
    %579 = vmatprep.subr.mxu0 0.0
    %v580 = vand.u32 %v33, 4294901760
    %581 = vmatpush1.msra.mxu0 %v580
    %582 = vmatprep.subr.mxu0 0.0
    %v583 = vand.u32 %v34, 4294901760
    %584 = vmatpush1.msra.mxu0 %v583
    %585 = vmatprep.subr.mxu0 0.0
    %v586 = vand.u32 %v35, 4294901760
    %587 = vmatpush1.msra.mxu0 %v586
    %588 = vmatprep.subr.mxu0 0.0
    %v589 = vand.u32 %v36, 4294901760
    %590 = vmatpush1.msra.mxu0 %v589
    %591 = vmatprep.subr.mxu0 0.0
    %v592 = vand.u32 %v37, 4294901760
    %593 = vmatpush1.msra.mxu0 %v592
    %594 = vmatprep.subr.mxu0 0.0
    %v595 = vand.u32 %v38, 4294901760
    %596 = vmatpush1.msra.mxu0 %v595
    %597 = vmatprep.subr.mxu0 0.0
    %v598 = vand.u32 %v39, 4294901760
    %599 = vmatpush1.msra.mxu0 %v598
    %600 = vmatprep.subr.mxu0 0.0
    %v601 = vand.u32 %v40, 4294901760
    %602 = vmatpush1.msra.mxu0 %v601
    %603 = vmatprep.subr.mxu0 0.0
    %v604 = vand.u32 %v41, 4294901760
    %605 = vmatpush1.msra.mxu0 %v604
    %606 = vmatprep.subr.mxu0 0.0
    %v607 = vand.u32 %v42, 4294901760
    %608 = vmatpush1.msra.mxu0 %v607
    %609 = vmatprep.subr.mxu0 0.0
    %v610 = vand.u32 %v43, 4294901760
    %611 = vmatpush1.msra.mxu0 %v610
    %612 = vmatprep.subr.mxu0 0.0
    %v613 = vand.u32 %v44, 4294901760
    %614 = vmatpush1.msra.mxu0 %v613
    %615 = vmatprep.subr.mxu0 0.0
    %v616 = vand.u32 %v45, 4294901760
    %617 = vmatpush1.msra.mxu0 %v616
    %618 = vmatprep.subr.mxu0 0.0
    %v619 = vand.u32 %v46, 4294901760
    %620 = vmatpush1.msra.mxu0 %v619
    %621 = vmatprep.subr.mxu0 0.0
    %v622 = vand.u32 %v47, 4294901760
    %623 = vmatpush1.msra.mxu0 %v622
    %624 = vmatprep.subr.mxu0 0.0
    %v625 = vand.u32 %v48, 4294901760
    %626 = vmatpush1.msra.mxu0 %v625
    %v627 = vand.u32 %v16, 4294901760
    %v628 = vsub.f32 %v16, %v627
    %v629 = vand.u32 %v628, 4294901760
    %630 = vmatprep.mubr.f32.mxu0 %v629
    %v631 = vand.u32 %v15, 4294901760
    %v632 = vsub.f32 %v15, %v631
    %v633 = vand.u32 %v632, 4294901760
    %634 = vmatmul.mubr.f32.gmra.mrb[0].mxu0 %v633
    %v635 = vpop.f32.mrb[0].mxu0
    %v636 = vadd.f32 %v528, %v635
    %v637 = vpop.f32.mrb[0].mxu0
    %638 = vdwg.mxu0
    %639 = vmatprep.subr.mxu0 0.0
    %v640 = vand.u32 %v17, 4294901760
    %v641 = vsub.f32 %v17, %v640
    %v642 = vand.u32 %v641, 4294901760
    %643 = vmatpush1.msra.mxu0 %v642
    %644 = vmatprep.subr.mxu0 0.0
    %v645 = vand.u32 %v18, 4294901760
    %v646 = vsub.f32 %v18, %v645
    %v647 = vand.u32 %v646, 4294901760
    %648 = vmatpush1.msra.mxu0 %v647
    %649 = vmatprep.subr.mxu0 0.0
    %v650 = vand.u32 %v19, 4294901760
    %v651 = vsub.f32 %v19, %v650
    %v652 = vand.u32 %v651, 4294901760
    %653 = vmatpush1.msra.mxu0 %v652
    %654 = vmatprep.subr.mxu0 0.0
    %v655 = vand.u32 %v20, 4294901760
    %v656 = vsub.f32 %v20, %v655
    %v657 = vand.u32 %v656, 4294901760
    %658 = vmatpush1.msra.mxu0 %v657
    %659 = vmatprep.subr.mxu0 0.0
    %v660 = vand.u32 %v21, 4294901760
    %v661 = vsub.f32 %v21, %v660
    %v662 = vand.u32 %v661, 4294901760
    %663 = vmatpush1.msra.mxu0 %v662
    %664 = vmatprep.subr.mxu0 0.0
    %v665 = vand.u32 %v22, 4294901760
    %v666 = vsub.f32 %v22, %v665
    %v667 = vand.u32 %v666, 4294901760
    %668 = vmatpush1.msra.mxu0 %v667
    %669 = vmatprep.subr.mxu0 0.0
    %v670 = vand.u32 %v23, 4294901760
    %v671 = vsub.f32 %v23, %v670
    %v672 = vand.u32 %v671, 4294901760
    %673 = vmatpush1.msra.mxu0 %v672
    %674 = vmatprep.subr.mxu0 0.0
    %v675 = vand.u32 %v24, 4294901760
    %v676 = vsub.f32 %v24, %v675
    %v677 = vand.u32 %v676, 4294901760
    %678 = vmatpush1.msra.mxu0 %v677
    %679 = vmatprep.subr.mxu0 0.0
    %v680 = vand.u32 %v25, 4294901760
    %v681 = vsub.f32 %v25, %v680
    %v682 = vand.u32 %v681, 4294901760
    %683 = vmatpush1.msra.mxu0 %v682
    %684 = vmatprep.subr.mxu0 0.0
    %v685 = vand.u32 %v26, 4294901760
    %v686 = vsub.f32 %v26, %v685
    %v687 = vand.u32 %v686, 4294901760
    %688 = vmatpush1.msra.mxu0 %v687
    %689 = vmatprep.subr.mxu0 0.0
    %v690 = vand.u32 %v27, 4294901760
    %v691 = vsub.f32 %v27, %v690
    %v692 = vand.u32 %v691, 4294901760
    %693 = vmatpush1.msra.mxu0 %v692
    %694 = vmatprep.subr.mxu0 0.0
    %v695 = vand.u32 %v28, 4294901760
    %v696 = vsub.f32 %v28, %v695
    %v697 = vand.u32 %v696, 4294901760
    %698 = vmatpush1.msra.mxu0 %v697
    %699 = vmatprep.subr.mxu0 0.0
    %v700 = vand.u32 %v29, 4294901760
    %v701 = vsub.f32 %v29, %v700
    %v702 = vand.u32 %v701, 4294901760
    %703 = vmatpush1.msra.mxu0 %v702
    %704 = vmatprep.subr.mxu0 0.0
    %v705 = vand.u32 %v30, 4294901760
    %v706 = vsub.f32 %v30, %v705
    %v707 = vand.u32 %v706, 4294901760
    %708 = vmatpush1.msra.mxu0 %v707
    %709 = vmatprep.subr.mxu0 0.0
    %v710 = vand.u32 %v31, 4294901760
    %v711 = vsub.f32 %v31, %v710
    %v712 = vand.u32 %v711, 4294901760
    %713 = vmatpush1.msra.mxu0 %v712
    %714 = vmatprep.subr.mxu0 0.0
    %v715 = vand.u32 %v32, 4294901760
    %v716 = vsub.f32 %v32, %v715
    %v717 = vand.u32 %v716, 4294901760
    %718 = vmatpush1.msra.mxu0 %v717
    %719 = vmatprep.subr.mxu0 0.0
    %v720 = vand.u32 %v33, 4294901760
    %v721 = vsub.f32 %v33, %v720
    %v722 = vand.u32 %v721, 4294901760
    %723 = vmatpush1.msra.mxu0 %v722
    %724 = vmatprep.subr.mxu0 0.0
    %v725 = vand.u32 %v34, 4294901760
    %v726 = vsub.f32 %v34, %v725
    %v727 = vand.u32 %v726, 4294901760
    %728 = vmatpush1.msra.mxu0 %v727
    %729 = vmatprep.subr.mxu0 0.0
    %v730 = vand.u32 %v35, 4294901760
    %v731 = vsub.f32 %v35, %v730
    %v732 = vand.u32 %v731, 4294901760
    %733 = vmatpush1.msra.mxu0 %v732
    %734 = vmatprep.subr.mxu0 0.0
    %v735 = vand.u32 %v36, 4294901760
    %v736 = vsub.f32 %v36, %v735
    %v737 = vand.u32 %v736, 4294901760
    %738 = vmatpush1.msra.mxu0 %v737
    %739 = vmatprep.subr.mxu0 0.0
    %v740 = vand.u32 %v37, 4294901760
    %v741 = vsub.f32 %v37, %v740
    %v742 = vand.u32 %v741, 4294901760
    %743 = vmatpush1.msra.mxu0 %v742
    %744 = vmatprep.subr.mxu0 0.0
    %v745 = vand.u32 %v38, 4294901760
    %v746 = vsub.f32 %v38, %v745
    %v747 = vand.u32 %v746, 4294901760
    %748 = vmatpush1.msra.mxu0 %v747
    %749 = vmatprep.subr.mxu0 0.0
    %v750 = vand.u32 %v39, 4294901760
    %v751 = vsub.f32 %v39, %v750
    %v752 = vand.u32 %v751, 4294901760
    %753 = vmatpush1.msra.mxu0 %v752
    %754 = vmatprep.subr.mxu0 0.0
    %v755 = vand.u32 %v40, 4294901760
    %v756 = vsub.f32 %v40, %v755
    %v757 = vand.u32 %v756, 4294901760
    %758 = vmatpush1.msra.mxu0 %v757
    %759 = vmatprep.subr.mxu0 0.0
    %v760 = vand.u32 %v41, 4294901760
    %v761 = vsub.f32 %v41, %v760
    %v762 = vand.u32 %v761, 4294901760
    %763 = vmatpush1.msra.mxu0 %v762
    %764 = vmatprep.subr.mxu0 0.0
    %v765 = vand.u32 %v42, 4294901760
    %v766 = vsub.f32 %v42, %v765
    %v767 = vand.u32 %v766, 4294901760
    %768 = vmatpush1.msra.mxu0 %v767
    %769 = vmatprep.subr.mxu0 0.0
    %v770 = vand.u32 %v43, 4294901760
    %v771 = vsub.f32 %v43, %v770
    %v772 = vand.u32 %v771, 4294901760
    %773 = vmatpush1.msra.mxu0 %v772
    %774 = vmatprep.subr.mxu0 0.0
    %v775 = vand.u32 %v44, 4294901760
    %v776 = vsub.f32 %v44, %v775
    %v777 = vand.u32 %v776, 4294901760
    %778 = vmatpush1.msra.mxu0 %v777
    %779 = vmatprep.subr.mxu0 0.0
    %v780 = vand.u32 %v45, 4294901760
    %v781 = vsub.f32 %v45, %v780
    %v782 = vand.u32 %v781, 4294901760
    %783 = vmatpush1.msra.mxu0 %v782
    %784 = vmatprep.subr.mxu0 0.0
    %v785 = vand.u32 %v46, 4294901760
    %v786 = vsub.f32 %v46, %v785
    %v787 = vand.u32 %v786, 4294901760
    %788 = vmatpush1.msra.mxu0 %v787
    %789 = vmatprep.subr.mxu0 0.0
    %v790 = vand.u32 %v47, 4294901760
    %v791 = vsub.f32 %v47, %v790
    %v792 = vand.u32 %v791, 4294901760
    %793 = vmatpush1.msra.mxu0 %v792
    %794 = vmatprep.subr.mxu0 0.0
    %v795 = vand.u32 %v48, 4294901760
    %v796 = vsub.f32 %v48, %v795
    %v797 = vand.u32 %v796, 4294901760
    %798 = vmatpush1.msra.mxu0 %v797
    %v799 = vand.u32 %v16, 4294901760
    %800 = vmatprep.mubr.f32.mxu0 %v799
    %v801 = vand.u32 %v15, 4294901760
    %802 = vmatmul.mubr.f32.gmra.mrb[0].mxu0 %v801
    %v803 = vpop.f32.mrb[0].mxu0
    %v804 = vadd.f32 %v636, %v803
    %v805 = vpop.f32.mrb[0].mxu0
    %806 = vdwg.mxu0
    %807 = vmatprep.subr.mxu0 0.0
    %v808 = vand.u32 %v17, 4294901760
    %809 = vmatpush1.msra.mxu0 %v808
    %810 = vmatprep.subr.mxu0 0.0
    %v811 = vand.u32 %v18, 4294901760
    %812 = vmatpush1.msra.mxu0 %v811
    %813 = vmatprep.subr.mxu0 0.0
    %v814 = vand.u32 %v19, 4294901760
    %815 = vmatpush1.msra.mxu0 %v814
    %816 = vmatprep.subr.mxu0 0.0
    %v817 = vand.u32 %v20, 4294901760
    %818 = vmatpush1.msra.mxu0 %v817
    %819 = vmatprep.subr.mxu0 0.0
    %v820 = vand.u32 %v21, 4294901760
    %821 = vmatpush1.msra.mxu0 %v820
    %822 = vmatprep.subr.mxu0 0.0
    %v823 = vand.u32 %v22, 4294901760
    %824 = vmatpush1.msra.mxu0 %v823
    %825 = vmatprep.subr.mxu0 0.0
    %v826 = vand.u32 %v23, 4294901760
    %827 = vmatpush1.msra.mxu0 %v826
    %828 = vmatprep.subr.mxu0 0.0
    %v829 = vand.u32 %v24, 4294901760
    %830 = vmatpush1.msra.mxu0 %v829
    %831 = vmatprep.subr.mxu0 0.0
    %v832 = vand.u32 %v25, 4294901760
    %833 = vmatpush1.msra.mxu0 %v832
    %834 = vmatprep.subr.mxu0 0.0
    %v835 = vand.u32 %v26, 4294901760
    %836 = vmatpush1.msra.mxu0 %v835
    %837 = vmatprep.subr.mxu0 0.0
    %v838 = vand.u32 %v27, 4294901760
    %839 = vmatpush1.msra.mxu0 %v838
    %840 = vmatprep.subr.mxu0 0.0
    %v841 = vand.u32 %v28, 4294901760
    %842 = vmatpush1.msra.mxu0 %v841
    %843 = vmatprep.subr.mxu0 0.0
    %v844 = vand.u32 %v29, 4294901760
    %845 = vmatpush1.msra.mxu0 %v844
    %846 = vmatprep.subr.mxu0 0.0
    %v847 = vand.u32 %v30, 4294901760
    %848 = vmatpush1.msra.mxu0 %v847
    %849 = vmatprep.subr.mxu0 0.0
    %v850 = vand.u32 %v31, 4294901760
    %851 = vmatpush1.msra.mxu0 %v850
    %852 = vmatprep.subr.mxu0 0.0
    %v853 = vand.u32 %v32, 4294901760
    %854 = vmatpush1.msra.mxu0 %v853
    %855 = vmatprep.subr.mxu0 0.0
    %v856 = vand.u32 %v33, 4294901760
    %857 = vmatpush1.msra.mxu0 %v856
    %858 = vmatprep.subr.mxu0 0.0
    %v859 = vand.u32 %v34, 4294901760
    %860 = vmatpush1.msra.mxu0 %v859
    %861 = vmatprep.subr.mxu0 0.0
    %v862 = vand.u32 %v35, 4294901760
    %863 = vmatpush1.msra.mxu0 %v862
    %864 = vmatprep.subr.mxu0 0.0
    %v865 = vand.u32 %v36, 4294901760
    %866 = vmatpush1.msra.mxu0 %v865
    %867 = vmatprep.subr.mxu0 0.0
    %v868 = vand.u32 %v37, 4294901760
    %869 = vmatpush1.msra.mxu0 %v868
    %870 = vmatprep.subr.mxu0 0.0
    %v871 = vand.u32 %v38, 4294901760
    %872 = vmatpush1.msra.mxu0 %v871
    %873 = vmatprep.subr.mxu0 0.0
    %v874 = vand.u32 %v39, 4294901760
    %875 = vmatpush1.msra.mxu0 %v874
    %876 = vmatprep.subr.mxu0 0.0
    %v877 = vand.u32 %v40, 4294901760
    %878 = vmatpush1.msra.mxu0 %v877
    %879 = vmatprep.subr.mxu0 0.0
    %v880 = vand.u32 %v41, 4294901760
    %881 = vmatpush1.msra.mxu0 %v880
    %882 = vmatprep.subr.mxu0 0.0
    %v883 = vand.u32 %v42, 4294901760
    %884 = vmatpush1.msra.mxu0 %v883
    %885 = vmatprep.subr.mxu0 0.0
    %v886 = vand.u32 %v43, 4294901760
    %887 = vmatpush1.msra.mxu0 %v886
    %888 = vmatprep.subr.mxu0 0.0
    %v889 = vand.u32 %v44, 4294901760
    %890 = vmatpush1.msra.mxu0 %v889
    %891 = vmatprep.subr.mxu0 0.0
    %v892 = vand.u32 %v45, 4294901760
    %893 = vmatpush1.msra.mxu0 %v892
    %894 = vmatprep.subr.mxu0 0.0
    %v895 = vand.u32 %v46, 4294901760
    %896 = vmatpush1.msra.mxu0 %v895
    %897 = vmatprep.subr.mxu0 0.0
    %v898 = vand.u32 %v47, 4294901760
    %899 = vmatpush1.msra.mxu0 %v898
    %900 = vmatprep.subr.mxu0 0.0
    %v901 = vand.u32 %v48, 4294901760
    %902 = vmatpush1.msra.mxu0 %v901
    %v903 = vand.u32 %v16, 4294901760
    %904 = vmatprep.mubr.f32.mxu0 %v903
    %v905 = vand.u32 %v15, 4294901760
    %906 = vmatmul.mubr.f32.gmra.mrb[0].mxu0 %v905
    %v907 = vpop.f32.mrb[0].mxu0
    %v908 = vadd.f32 %v804, %v907
    %v909 = vpop.f32.mrb[0].mxu0
    %910 = vdwg.mxu0
    %v911 = vld [vmem:[%s1] sm:$0xff]
    %v912 = vld [vmem:[%s1 + $0x8] sm:$0xff]
    %vm913 = vcmask 64512
    %v915 = vsel %vm913, %v911, 0
    %v918 = vsel %vm913, %v912, 0
    %920 = vmatprep.subr.mxu0 0.0
    %v921 = vand.u32 %v908, 4294901760
    %922 = vmatpush1.msra.mxu0 %v921
    %923 = vmatprep.subr.mxu0 0.0
    %924 = vmatpush1.msra.mxu0 0.0
    %925 = vmatprep.subr.mxu0 0.0
    %926 = vmatpush1.msra.mxu0 0.0
    %927 = vmatprep.subr.mxu0 0.0
    %928 = vmatpush1.msra.mxu0 0.0
    %929 = vmatprep.subr.mxu0 0.0
    %930 = vmatpush1.msra.mxu0 0.0
    %931 = vmatprep.subr.mxu0 0.0
    %932 = vmatpush1.msra.mxu0 0.0
    %933 = vmatprep.subr.mxu0 0.0
    %934 = vmatpush1.msra.mxu0 0.0
    %935 = vmatprep.subr.mxu0 0.0
    %936 = vmatpush1.msra.mxu0 0.0
    %937 = vmatprep.subr.mxu0 0.0
    %938 = vmatpush1.msra.mxu0 0.0
    %939 = vmatprep.subr.mxu0 0.0
    %940 = vmatpush1.msra.mxu0 0.0
    %941 = vmatprep.subr.mxu0 0.0
    %942 = vmatpush1.msra.mxu0 0.0
    %943 = vmatprep.subr.mxu0 0.0
    %944 = vmatpush1.msra.mxu0 0.0
    %945 = vmatprep.subr.mxu0 0.0
    %946 = vmatpush1.msra.mxu0 0.0
    %947 = vmatprep.subr.mxu0 0.0
    %948 = vmatpush1.msra.mxu0 0.0
    %949 = vmatprep.subr.mxu0 0.0
    %950 = vmatpush1.msra.mxu0 0.0
    %951 = vmatprep.subr.mxu0 0.0
    %952 = vmatpush1.msra.mxu0 0.0
    %953 = vmatprep.subr.mxu0 0.0
    %954 = vmatpush1.msra.mxu0 0.0
    %955 = vmatprep.subr.mxu0 0.0
    %956 = vmatpush1.msra.mxu0 0.0
    %957 = vmatprep.subr.mxu0 0.0
    %958 = vmatpush1.msra.mxu0 0.0
    %959 = vmatprep.subr.mxu0 0.0
    %960 = vmatpush1.msra.mxu0 0.0
    %961 = vmatprep.subr.mxu0 0.0
    %962 = vmatpush1.msra.mxu0 0.0
    %963 = vmatprep.subr.mxu0 0.0
    %964 = vmatpush1.msra.mxu0 0.0
    %965 = vmatprep.subr.mxu0 0.0
    %966 = vmatpush1.msra.mxu0 0.0
    %967 = vmatprep.subr.mxu0 0.0
    %968 = vmatpush1.msra.mxu0 0.0
    %969 = vmatprep.subr.mxu0 0.0
    %970 = vmatpush1.msra.mxu0 0.0
    %971 = vmatprep.subr.mxu0 0.0
    %972 = vmatpush1.msra.mxu0 0.0
    %973 = vmatprep.subr.mxu0 0.0
    %974 = vmatpush1.msra.mxu0 0.0
    %975 = vmatprep.subr.mxu0 0.0
    %976 = vmatpush1.msra.mxu0 0.0
    %977 = vmatprep.subr.mxu0 0.0
    %978 = vmatpush1.msra.mxu0 0.0
    %979 = vmatprep.subr.mxu0 0.0
    %980 = vmatpush1.msra.mxu0 0.0
    %981 = vmatprep.subr.mxu0 0.0
    %982 = vmatpush1.msra.mxu0 0.0
    %983 = vmatprep.subr.mxu0 0.0
    %984 = vmatpush1.msra.mxu0 0.0
    %985 = vmatprep.mubr.f32.mxu0 0.0
    %v986 = vand.u32 %v915, 4294901760
    %v987 = vsub.f32 %v915, %v986
    %v988 = vand.u32 %v987, 4294901760
    %v989 = vsub.f32 %v987, %v988
    %v990 = vand.u32 %v989, 4294901760
    %991 = vmatmul.mubr.f32.gmra.mrb[0].mxu0 %v990
    %v992 = vpop.f32.mrb[0].mxu0
    %v993 = vadd.f32 0.0, %v992
    %v994 = vpop.f32.mrb[0].mxu0
    %995 = vmatprep.mubr.f32.mxu0 0.0
    %v996 = vand.u32 %v918, 4294901760
    %v997 = vsub.f32 %v918, %v996
    %v998 = vand.u32 %v997, 4294901760
    %v999 = vsub.f32 %v997, %v998
    %v1000 = vand.u32 %v999, 4294901760
    %1001 = vmatmul.mubr.f32.gmra.mrb[0].mxu0 %v1000
    %v1002 = vpop.f32.mrb[0].mxu0
    %v1003 = vadd.f32 0.0, %v1002
    %v1004 = vpop.f32.mrb[0].mxu0
    %1005 = vdwg.mxu0
    %1006 = vmatprep.subr.mxu0 0.0
    %v1007 = vand.u32 %v908, 4294901760
    %v1008 = vsub.f32 %v908, %v1007
    %v1009 = vand.u32 %v1008, 4294901760
    %v1010 = vsub.f32 %v1008, %v1009
    %v1011 = vand.u32 %v1010, 4294901760
    %1012 = vmatpush1.msra.mxu0 %v1011
    %1013 = vmatprep.subr.mxu0 0.0
    %1014 = vmatpush1.msra.mxu0 0.0
    %1015 = vmatprep.subr.mxu0 0.0
    %1016 = vmatpush1.msra.mxu0 0.0
    %1017 = vmatprep.subr.mxu0 0.0
    %1018 = vmatpush1.msra.mxu0 0.0
    %1019 = vmatprep.subr.mxu0 0.0
    %1020 = vmatpush1.msra.mxu0 0.0
    %1021 = vmatprep.subr.mxu0 0.0
    %1022 = vmatpush1.msra.mxu0 0.0
    %1023 = vmatprep.subr.mxu0 0.0
    %1024 = vmatpush1.msra.mxu0 0.0
    %1025 = vmatprep.subr.mxu0 0.0
    %1026 = vmatpush1.msra.mxu0 0.0
    %1027 = vmatprep.subr.mxu0 0.0
    %1028 = vmatpush1.msra.mxu0 0.0
    %1029 = vmatprep.subr.mxu0 0.0
    %1030 = vmatpush1.msra.mxu0 0.0
    %1031 = vmatprep.subr.mxu0 0.0
    %1032 = vmatpush1.msra.mxu0 0.0
    %1033 = vmatprep.subr.mxu0 0.0
    %1034 = vmatpush1.msra.mxu0 0.0
    %1035 = vmatprep.subr.mxu0 0.0
    %1036 = vmatpush1.msra.mxu0 0.0
    %1037 = vmatprep.subr.mxu0 0.0
    %1038 = vmatpush1.msra.mxu0 0.0
    %1039 = vmatprep.subr.mxu0 0.0
    %1040 = vmatpush1.msra.mxu0 0.0
    %1041 = vmatprep.subr.mxu0 0.0
    %1042 = vmatpush1.msra.mxu0 0.0
    %1043 = vmatprep.subr.mxu0 0.0
    %1044 = vmatpush1.msra.mxu0 0.0
    %1045 = vmatprep.subr.mxu0 0.0
    %1046 = vmatpush1.msra.mxu0 0.0
    %1047 = vmatprep.subr.mxu0 0.0
    %1048 = vmatpush1.msra.mxu0 0.0
    %1049 = vmatprep.subr.mxu0 0.0
    %1050 = vmatpush1.msra.mxu0 0.0
    %1051 = vmatprep.subr.mxu0 0.0
    %1052 = vmatpush1.msra.mxu0 0.0
    %1053 = vmatprep.subr.mxu0 0.0
    %1054 = vmatpush1.msra.mxu0 0.0
    %1055 = vmatprep.subr.mxu0 0.0
    %1056 = vmatpush1.msra.mxu0 0.0
    %1057 = vmatprep.subr.mxu0 0.0
    %1058 = vmatpush1.msra.mxu0 0.0
    %1059 = vmatprep.subr.mxu0 0.0
    %1060 = vmatpush1.msra.mxu0 0.0
    %1061 = vmatprep.subr.mxu0 0.0
    %1062 = vmatpush1.msra.mxu0 0.0
    %1063 = vmatprep.subr.mxu0 0.0
    %1064 = vmatpush1.msra.mxu0 0.0
    %1065 = vmatprep.subr.mxu0 0.0
    %1066 = vmatpush1.msra.mxu0 0.0
    %1067 = vmatprep.subr.mxu0 0.0
    %1068 = vmatpush1.msra.mxu0 0.0
    %1069 = vmatprep.subr.mxu0 0.0
    %1070 = vmatpush1.msra.mxu0 0.0
    %1071 = vmatprep.subr.mxu0 0.0
    %1072 = vmatpush1.msra.mxu0 0.0
    %1073 = vmatprep.subr.mxu0 0.0
    %1074 = vmatpush1.msra.mxu0 0.0
    %1075 = vmatprep.mubr.f32.mxu0 0.0
    %v1076 = vand.u32 %v915, 4294901760
    %1077 = vmatmul.mubr.f32.gmra.mrb[0].mxu0 %v1076
    %v1078 = vpop.f32.mrb[0].mxu0
    %v1079 = vadd.f32 %v993, %v1078
    %v1080 = vpop.f32.mrb[0].mxu0
    %1081 = vmatprep.mubr.f32.mxu0 0.0
    %v1082 = vand.u32 %v918, 4294901760
    %1083 = vmatmul.mubr.f32.gmra.mrb[0].mxu0 %v1082
    %v1084 = vpop.f32.mrb[0].mxu0
    %v1085 = vadd.f32 %v1003, %v1084
    %v1086 = vpop.f32.mrb[0].mxu0
    %1087 = vdwg.mxu0
    %1088 = vmatprep.subr.mxu0 0.0
    %v1089 = vand.u32 %v908, 4294901760
    %v1090 = vsub.f32 %v908, %v1089
    %1091 = vmatpush1.msra.mxu0 %v1090
    %1092 = vmatprep.subr.mxu0 0.0
    %1093 = vmatpush1.msra.mxu0 0.0
    %1094 = vmatprep.subr.mxu0 0.0
    %1095 = vmatpush1.msra.mxu0 0.0
    %1096 = vmatprep.subr.mxu0 0.0
    %1097 = vmatpush1.msra.mxu0 0.0
    %1098 = vmatprep.subr.mxu0 0.0
    %1099 = vmatpush1.msra.mxu0 0.0
    %1100 = vmatprep.subr.mxu0 0.0
    %1101 = vmatpush1.msra.mxu0 0.0
    %1102 = vmatprep.subr.mxu0 0.0
    %1103 = vmatpush1.msra.mxu0 0.0
    %1104 = vmatprep.subr.mxu0 0.0
    %1105 = vmatpush1.msra.mxu0 0.0
    %1106 = vmatprep.subr.mxu0 0.0
    %1107 = vmatpush1.msra.mxu0 0.0
    %1108 = vmatprep.subr.mxu0 0.0
    %1109 = vmatpush1.msra.mxu0 0.0
    %1110 = vmatprep.subr.mxu0 0.0
    %1111 = vmatpush1.msra.mxu0 0.0
    %1112 = vmatprep.subr.mxu0 0.0
    %1113 = vmatpush1.msra.mxu0 0.0
    %1114 = vmatprep.subr.mxu0 0.0
    %1115 = vmatpush1.msra.mxu0 0.0
    %1116 = vmatprep.subr.mxu0 0.0
    %1117 = vmatpush1.msra.mxu0 0.0
    %1118 = vmatprep.subr.mxu0 0.0
    %1119 = vmatpush1.msra.mxu0 0.0
    %1120 = vmatprep.subr.mxu0 0.0
    %1121 = vmatpush1.msra.mxu0 0.0
    %1122 = vmatprep.subr.mxu0 0.0
    %1123 = vmatpush1.msra.mxu0 0.0
    %1124 = vmatprep.subr.mxu0 0.0
    %1125 = vmatpush1.msra.mxu0 0.0
    %1126 = vmatprep.subr.mxu0 0.0
    %1127 = vmatpush1.msra.mxu0 0.0
    %1128 = vmatprep.subr.mxu0 0.0
    %1129 = vmatpush1.msra.mxu0 0.0
    %1130 = vmatprep.subr.mxu0 0.0
    %1131 = vmatpush1.msra.mxu0 0.0
    %1132 = vmatprep.subr.mxu0 0.0
    %1133 = vmatpush1.msra.mxu0 0.0
    %1134 = vmatprep.subr.mxu0 0.0
    %1135 = vmatpush1.msra.mxu0 0.0
    %1136 = vmatprep.subr.mxu0 0.0
    %1137 = vmatpush1.msra.mxu0 0.0
    %1138 = vmatprep.subr.mxu0 0.0
    %1139 = vmatpush1.msra.mxu0 0.0
    %1140 = vmatprep.subr.mxu0 0.0
    %1141 = vmatpush1.msra.mxu0 0.0
    %1142 = vmatprep.subr.mxu0 0.0
    %1143 = vmatpush1.msra.mxu0 0.0
    %1144 = vmatprep.subr.mxu0 0.0
    %1145 = vmatpush1.msra.mxu0 0.0
    %1146 = vmatprep.subr.mxu0 0.0
    %1147 = vmatpush1.msra.mxu0 0.0
    %1148 = vmatprep.subr.mxu0 0.0
    %1149 = vmatpush1.msra.mxu0 0.0
    %1150 = vmatprep.subr.mxu0 0.0
    %1151 = vmatpush1.msra.mxu0 0.0
    %1152 = vmatprep.subr.mxu0 0.0
    %1153 = vmatpush1.msra.mxu0 0.0
    %1154 = vmatprep.mubr.f32.mxu0 0.0
    %v1155 = vand.u32 %v915, 4294901760
    %v1156 = vsub.f32 %v915, %v1155
    %1157 = vmatmul.mubr.f32.gmra.mrb[0].mxu0 %v1156
    %v1158 = vpop.f32.mrb[0].mxu0
    %v1159 = vadd.f32 %v1079, %v1158
    %v1160 = vpop.f32.mrb[0].mxu0
    %1161 = vmatprep.mubr.f32.mxu0 0.0
    %v1162 = vand.u32 %v918, 4294901760
    %v1163 = vsub.f32 %v918, %v1162
    %1164 = vmatmul.mubr.f32.gmra.mrb[0].mxu0 %v1163
    %v1165 = vpop.f32.mrb[0].mxu0
    %v1166 = vadd.f32 %v1085, %v1165
    %v1167 = vpop.f32.mrb[0].mxu0
    %1168 = vdwg.mxu0
    %1169 = vmatprep.subr.mxu0 0.0
    %v1170 = vand.u32 %v908, 4294901760
    %1171 = vmatpush1.msra.mxu0 %v1170
    %1172 = vmatprep.subr.mxu0 0.0
    %1173 = vmatpush1.msra.mxu0 0.0
    %1174 = vmatprep.subr.mxu0 0.0
    %1175 = vmatpush1.msra.mxu0 0.0
    %1176 = vmatprep.subr.mxu0 0.0
    %1177 = vmatpush1.msra.mxu0 0.0
    %1178 = vmatprep.subr.mxu0 0.0
    %1179 = vmatpush1.msra.mxu0 0.0
    %1180 = vmatprep.subr.mxu0 0.0
    %1181 = vmatpush1.msra.mxu0 0.0
    %1182 = vmatprep.subr.mxu0 0.0
    %1183 = vmatpush1.msra.mxu0 0.0
    %1184 = vmatprep.subr.mxu0 0.0
    %1185 = vmatpush1.msra.mxu0 0.0
    %1186 = vmatprep.subr.mxu0 0.0
    %1187 = vmatpush1.msra.mxu0 0.0
    %1188 = vmatprep.subr.mxu0 0.0
    %1189 = vmatpush1.msra.mxu0 0.0
    %1190 = vmatprep.subr.mxu0 0.0
    %1191 = vmatpush1.msra.mxu0 0.0
    %1192 = vmatprep.subr.mxu0 0.0
    %1193 = vmatpush1.msra.mxu0 0.0
    %1194 = vmatprep.subr.mxu0 0.0
    %1195 = vmatpush1.msra.mxu0 0.0
    %1196 = vmatprep.subr.mxu0 0.0
    %1197 = vmatpush1.msra.mxu0 0.0
    %1198 = vmatprep.subr.mxu0 0.0
    %1199 = vmatpush1.msra.mxu0 0.0
    %1200 = vmatprep.subr.mxu0 0.0
    %1201 = vmatpush1.msra.mxu0 0.0
    %1202 = vmatprep.subr.mxu0 0.0
    %1203 = vmatpush1.msra.mxu0 0.0
    %1204 = vmatprep.subr.mxu0 0.0
    %1205 = vmatpush1.msra.mxu0 0.0
    %1206 = vmatprep.subr.mxu0 0.0
    %1207 = vmatpush1.msra.mxu0 0.0
    %1208 = vmatprep.subr.mxu0 0.0
    %1209 = vmatpush1.msra.mxu0 0.0
    %1210 = vmatprep.subr.mxu0 0.0
    %1211 = vmatpush1.msra.mxu0 0.0
    %1212 = vmatprep.subr.mxu0 0.0
    %1213 = vmatpush1.msra.mxu0 0.0
    %1214 = vmatprep.subr.mxu0 0.0
    %1215 = vmatpush1.msra.mxu0 0.0
    %1216 = vmatprep.subr.mxu0 0.0
    %1217 = vmatpush1.msra.mxu0 0.0
    %1218 = vmatprep.subr.mxu0 0.0
    %1219 = vmatpush1.msra.mxu0 0.0
    %1220 = vmatprep.subr.mxu0 0.0
    %1221 = vmatpush1.msra.mxu0 0.0
    %1222 = vmatprep.subr.mxu0 0.0
    %1223 = vmatpush1.msra.mxu0 0.0
    %1224 = vmatprep.subr.mxu0 0.0
    %1225 = vmatpush1.msra.mxu0 0.0
    %1226 = vmatprep.subr.mxu0 0.0
    %1227 = vmatpush1.msra.mxu0 0.0
    %1228 = vmatprep.subr.mxu0 0.0
    %1229 = vmatpush1.msra.mxu0 0.0
    %1230 = vmatprep.subr.mxu0 0.0
    %1231 = vmatpush1.msra.mxu0 0.0
    %1232 = vmatprep.subr.mxu0 0.0
    %1233 = vmatpush1.msra.mxu0 0.0
    %1234 = vmatprep.mubr.f32.mxu0 0.0
    %v1235 = vand.u32 %v915, 4294901760
    %v1236 = vsub.f32 %v915, %v1235
    %v1237 = vand.u32 %v1236, 4294901760
    %1238 = vmatmul.mubr.f32.gmra.mrb[0].mxu0 %v1237
    %v1239 = vpop.f32.mrb[0].mxu0
    %v1240 = vadd.f32 %v1159, %v1239
    %v1241 = vpop.f32.mrb[0].mxu0
    %1242 = vmatprep.mubr.f32.mxu0 0.0
    %v1243 = vand.u32 %v918, 4294901760
    %v1244 = vsub.f32 %v918, %v1243
    %v1245 = vand.u32 %v1244, 4294901760
    %1246 = vmatmul.mubr.f32.gmra.mrb[0].mxu0 %v1245
    %v1247 = vpop.f32.mrb[0].mxu0
    %v1248 = vadd.f32 %v1166, %v1247
    %v1249 = vpop.f32.mrb[0].mxu0
    %1250 = vdwg.mxu0
    %1251 = vmatprep.subr.mxu0 0.0
    %v1252 = vand.u32 %v908, 4294901760
    %v1253 = vsub.f32 %v908, %v1252
    %v1254 = vand.u32 %v1253, 4294901760
    %1255 = vmatpush1.msra.mxu0 %v1254
    %1256 = vmatprep.subr.mxu0 0.0
    %1257 = vmatpush1.msra.mxu0 0.0
    %1258 = vmatprep.subr.mxu0 0.0
    %1259 = vmatpush1.msra.mxu0 0.0
    %1260 = vmatprep.subr.mxu0 0.0
    %1261 = vmatpush1.msra.mxu0 0.0
    %1262 = vmatprep.subr.mxu0 0.0
    %1263 = vmatpush1.msra.mxu0 0.0
    %1264 = vmatprep.subr.mxu0 0.0
    %1265 = vmatpush1.msra.mxu0 0.0
    %1266 = vmatprep.subr.mxu0 0.0
    %1267 = vmatpush1.msra.mxu0 0.0
    %1268 = vmatprep.subr.mxu0 0.0
    %1269 = vmatpush1.msra.mxu0 0.0
    %1270 = vmatprep.subr.mxu0 0.0
    %1271 = vmatpush1.msra.mxu0 0.0
    %1272 = vmatprep.subr.mxu0 0.0
    %1273 = vmatpush1.msra.mxu0 0.0
    %1274 = vmatprep.subr.mxu0 0.0
    %1275 = vmatpush1.msra.mxu0 0.0
    %1276 = vmatprep.subr.mxu0 0.0
    %1277 = vmatpush1.msra.mxu0 0.0
    %1278 = vmatprep.subr.mxu0 0.0
    %1279 = vmatpush1.msra.mxu0 0.0
    %1280 = vmatprep.subr.mxu0 0.0
    %1281 = vmatpush1.msra.mxu0 0.0
    %1282 = vmatprep.subr.mxu0 0.0
    %1283 = vmatpush1.msra.mxu0 0.0
    %1284 = vmatprep.subr.mxu0 0.0
    %1285 = vmatpush1.msra.mxu0 0.0
    %1286 = vmatprep.subr.mxu0 0.0
    %1287 = vmatpush1.msra.mxu0 0.0
    %1288 = vmatprep.subr.mxu0 0.0
    %1289 = vmatpush1.msra.mxu0 0.0
    %1290 = vmatprep.subr.mxu0 0.0
    %1291 = vmatpush1.msra.mxu0 0.0
    %1292 = vmatprep.subr.mxu0 0.0
    %1293 = vmatpush1.msra.mxu0 0.0
    %1294 = vmatprep.subr.mxu0 0.0
    %1295 = vmatpush1.msra.mxu0 0.0
    %1296 = vmatprep.subr.mxu0 0.0
    %1297 = vmatpush1.msra.mxu0 0.0
    %1298 = vmatprep.subr.mxu0 0.0
    %1299 = vmatpush1.msra.mxu0 0.0
    %1300 = vmatprep.subr.mxu0 0.0
    %1301 = vmatpush1.msra.mxu0 0.0
    %1302 = vmatprep.subr.mxu0 0.0
    %1303 = vmatpush1.msra.mxu0 0.0
    %1304 = vmatprep.subr.mxu0 0.0
    %1305 = vmatpush1.msra.mxu0 0.0
    %1306 = vmatprep.subr.mxu0 0.0
    %1307 = vmatpush1.msra.mxu0 0.0
    %1308 = vmatprep.subr.mxu0 0.0
    %1309 = vmatpush1.msra.mxu0 0.0
    %1310 = vmatprep.subr.mxu0 0.0
    %1311 = vmatpush1.msra.mxu0 0.0
    %1312 = vmatprep.subr.mxu0 0.0
    %1313 = vmatpush1.msra.mxu0 0.0
    %1314 = vmatprep.subr.mxu0 0.0
    %1315 = vmatpush1.msra.mxu0 0.0
    %1316 = vmatprep.subr.mxu0 0.0
    %1317 = vmatpush1.msra.mxu0 0.0
    %1318 = vmatprep.mubr.f32.mxu0 0.0
    %v1319 = vand.u32 %v915, 4294901760
    %1320 = vmatmul.mubr.f32.gmra.mrb[0].mxu0 %v1319
    %v1321 = vpop.f32.mrb[0].mxu0
    %v1322 = vadd.f32 %v1240, %v1321
    %v1323 = vpop.f32.mrb[0].mxu0
    %1324 = vmatprep.mubr.f32.mxu0 0.0
    %v1325 = vand.u32 %v918, 4294901760
    %1326 = vmatmul.mubr.f32.gmra.mrb[0].mxu0 %v1325
    %v1327 = vpop.f32.mrb[0].mxu0
    %v1328 = vadd.f32 %v1248, %v1327
    %v1329 = vpop.f32.mrb[0].mxu0
    %1330 = vdwg.mxu0
    %1331 = vmatprep.subr.mxu0 0.0
    %v1332 = vand.u32 %v908, 4294901760
    %1333 = vmatpush1.msra.mxu0 %v1332
    %1334 = vmatprep.subr.mxu0 0.0
    %1335 = vmatpush1.msra.mxu0 0.0
    %1336 = vmatprep.subr.mxu0 0.0
    %1337 = vmatpush1.msra.mxu0 0.0
    %1338 = vmatprep.subr.mxu0 0.0
    %1339 = vmatpush1.msra.mxu0 0.0
    %1340 = vmatprep.subr.mxu0 0.0
    %1341 = vmatpush1.msra.mxu0 0.0
    %1342 = vmatprep.subr.mxu0 0.0
    %1343 = vmatpush1.msra.mxu0 0.0
    %1344 = vmatprep.subr.mxu0 0.0
    %1345 = vmatpush1.msra.mxu0 0.0
    %1346 = vmatprep.subr.mxu0 0.0
    %1347 = vmatpush1.msra.mxu0 0.0
    %1348 = vmatprep.subr.mxu0 0.0
    %1349 = vmatpush1.msra.mxu0 0.0
    %1350 = vmatprep.subr.mxu0 0.0
    %1351 = vmatpush1.msra.mxu0 0.0
    %1352 = vmatprep.subr.mxu0 0.0
    %1353 = vmatpush1.msra.mxu0 0.0
    %1354 = vmatprep.subr.mxu0 0.0
    %1355 = vmatpush1.msra.mxu0 0.0
    %1356 = vmatprep.subr.mxu0 0.0
    %1357 = vmatpush1.msra.mxu0 0.0
    %1358 = vmatprep.subr.mxu0 0.0
    %1359 = vmatpush1.msra.mxu0 0.0
    %1360 = vmatprep.subr.mxu0 0.0
    %1361 = vmatpush1.msra.mxu0 0.0
    %1362 = vmatprep.subr.mxu0 0.0
    %1363 = vmatpush1.msra.mxu0 0.0
    %1364 = vmatprep.subr.mxu0 0.0
    %1365 = vmatpush1.msra.mxu0 0.0
    %1366 = vmatprep.subr.mxu0 0.0
    %1367 = vmatpush1.msra.mxu0 0.0
    %1368 = vmatprep.subr.mxu0 0.0
    %1369 = vmatpush1.msra.mxu0 0.0
    %1370 = vmatprep.subr.mxu0 0.0
    %1371 = vmatpush1.msra.mxu0 0.0
    %1372 = vmatprep.subr.mxu0 0.0
    %1373 = vmatpush1.msra.mxu0 0.0
    %1374 = vmatprep.subr.mxu0 0.0
    %1375 = vmatpush1.msra.mxu0 0.0
    %1376 = vmatprep.subr.mxu0 0.0
    %1377 = vmatpush1.msra.mxu0 0.0
    %1378 = vmatprep.subr.mxu0 0.0
    %1379 = vmatpush1.msra.mxu0 0.0
    %1380 = vmatprep.subr.mxu0 0.0
    %1381 = vmatpush1.msra.mxu0 0.0
    %1382 = vmatprep.subr.mxu0 0.0
    %1383 = vmatpush1.msra.mxu0 0.0
    %1384 = vmatprep.subr.mxu0 0.0
    %1385 = vmatpush1.msra.mxu0 0.0
    %1386 = vmatprep.subr.mxu0 0.0
    %1387 = vmatpush1.msra.mxu0 0.0
    %1388 = vmatprep.subr.mxu0 0.0
    %1389 = vmatpush1.msra.mxu0 0.0
    %1390 = vmatprep.subr.mxu0 0.0
    %1391 = vmatpush1.msra.mxu0 0.0
    %1392 = vmatprep.subr.mxu0 0.0
    %1393 = vmatpush1.msra.mxu0 0.0
    %1394 = vmatprep.subr.mxu0 0.0
    %1395 = vmatpush1.msra.mxu0 0.0
    %1396 = vmatprep.mubr.f32.mxu0 0.0
    %v1397 = vand.u32 %v915, 4294901760
    %1398 = vmatmul.mubr.f32.gmra.mrb[0].mxu0 %v1397
    %v1399 = vpop.f32.mrb[0].mxu0
    %v1400 = vadd.f32 %v1322, %v1399
    %v1401 = vpop.f32.mrb[0].mxu0
    %1402 = vmatprep.mubr.f32.mxu0 0.0
    %v1403 = vand.u32 %v918, 4294901760
    %1404 = vmatmul.mubr.f32.gmra.mrb[0].mxu0 %v1403
    %v1405 = vpop.f32.mrb[0].mxu0
    %v1406 = vadd.f32 %v1328, %v1405
    %v1407 = vpop.f32.mrb[0].mxu0
    %1408 = vdwg.mxu0
    %vm1409 = vcmask 523264
    %1410 = vst.msk [vmem:[#allocation2] sm:$0xff] %vm1409, %v1400
    %1411 = vst.msk [vmem:[#allocation2 + $0x8] sm:$0xff] %vm1409, %v1406
    // Predicated region
    $region14: #{tpu_custom_call.1} parent=1 // pred_check
      _
    $region15: #{tpu_custom_call.1} parent=1 // pred_check_branch
      %1413 = sbr.rel (0) target = $region17
    $region16: #{tpu_custom_call.1} parent=1 // pred_region
      %s1415 = ssub.s32 256, 256
      %1416 = vsyncadd [#allocation3], %s1415
      %s1417 = sshll.u32 [#allocation2], 4
      %s1418 = int_to_ptr.vmem [resolvable:$true] %s1417
      %1423 = dma.vmem_to_hbm [thread:$0]  %s1418, 256, %s3, [#allocation3], 128, 128, 8
    $region17: #{tpu_custom_call.1} parent=1 // pred_fallthru
      _
    // Predicated region
    $region18: #{tpu_custom_call.1} parent=1 // pred_check
      _
    $region19: #{tpu_custom_call.1} parent=1 // pred_check_branch
      %1425 = sbr.rel (0) target = $region21
    $region20: #{tpu_custom_call.1} parent=1 // pred_region
      %1426 = dma.done [#allocation3], 256
    $region21: #{tpu_custom_call.1} parent=1 // pred_fallthru
      _
    %1427 = vsyncpa [#allocation3], 1

</llo_original>
